<compile_context>
chip_gen: v6e
topology: v6e:2x2x1
jax: 0.10.0
libtpu: 0.0.40
codegen_flags: <defaults>
</compile_context>

<pallas_src>
import jax
import jax.numpy as jnp
from jax.experimental import pallas as pl
from jax.experimental.pallas import tpu as pltpu


def autoshape_head_kernel(x_ref, w_ref, b_ref, o_ref):
    """Fused AutoShape preprocess (/255 folded into w) + 1x1-conv head + sigmoid.

    x_ref : (1, C, TR, 128)   raw pixel tile (uint8 or float, values in [0,255]);
                              spatial axis split dense over (sublanes, lanes).
    w_ref : (OUT*C,)          SMEM head weights (row-major, already scaled by 1/255).
    b_ref : (OUT,)            SMEM bias.
    o_ref : (1, OUT, TR, 128) sigmoided head output; dense (TR, 128) slab stores.
    """
    C = x_ref.shape[1]
    OUT = o_ref.shape[1]

    # Upcast once; every slab below is a dense (TR, 128) tile (all 8 sublanes live).
    x = x_ref[0].astype(jnp.float32)                          # (C, TR, 128)

    # Tiny C -> OUT head: unrolled scalar*slab FMA chain on the VPU (an MXU
    # matmul would be <0.1% utilized). Sigmoid via EUP exp + approx reciprocal.
    for o in range(OUT):
        y = x[0] * w_ref[o * C + 0] + b_ref[o]                # (TR, 128)
        for c in range(1, C):
            y = y + x[c] * w_ref[o * C + c]
        sig = pl.reciprocal(1.0 + jnp.exp(-y), approx=True)   # EUP exp + vrcp
        o_ref[0, o] = sig.astype(o_ref.dtype)                 # dense slab store


def _choose_tile_rows(total_rows, req_rows, cap_rows, batch):
    """Pick the spatial tile height in 128-lane rows.

    Returns (tile_rows, padded_total_rows). tile_rows is a multiple of 8 (or the
    full extent for tiny inputs); padded_total_rows is a multiple of tile_rows.
    """
    tr = max(8, (min(req_rows, cap_rows) // 8) * 8)
    if batch == 1 and total_rows >= 16:
        # Keep >= 2 spatial grid steps so a 2-TC chip (v7x) can split the work.
        half = max(8, (((total_rows + 1) // 2) // 8) * 8)
        tr = min(tr, half)
    if total_rows <= tr:
        return total_rows, total_rows          # single full-extent block (allowed)
    padded = ((total_rows + tr - 1) // tr) * tr
    return tr, padded


def autoshape_forward(im_nchw, w, b, *, tile_s=65536, out_dtype=jnp.bfloat16):
    """AutoShape.forward numeric core (preprocess + detection head).

    im_nchw : (B, C, H, W) pixels in [0, 255]; uint8 preferred (float also works)
    w       : (C, OUT) float32 1x1-conv head weight
    b       : (1, OUT) or (OUT,) float32 bias
    returns : (B, OUT, H*W) sigmoided detection-head predictions (out_dtype)
    """
    B, C, H, W = im_nchw.shape
    S = H * W
    OUT = w.shape[-1]

    # Fold the /255 preprocess into the tiny head weights (commutes through the
    # linear head); flatten for cheap 1-D SMEM residency (no (8,128) padding).
    w_s = (jnp.asarray(w, jnp.float32).T * (1.0 / 255.0)).reshape(-1)   # (OUT*C,)
    b_s = jnp.asarray(b, jnp.float32).reshape(-1)                       # (OUT,)

    # Flatten spatial (metadata-only), then pad so (rows, 128) tiles evenly.
    x = im_nchw.reshape(B, C, S)
    rows0 = -(-S // 128)                                                # cdiv

    in_bytes = jnp.dtype(im_nchw.dtype).itemsize
    out_bytes = jnp.dtype(out_dtype).itemsize
    # Double-buffered in/out blocks + single f32 upcast temp, per row of 128 px.
    per_row_vmem = 2 * 128 * (C * in_bytes + OUT * out_bytes) + 128 * (C + 1) * 4
    cap_rows = max(8, (12 * 1024 * 1024) // per_row_vmem)   # ~12 MiB (< v5e 16 MiB scoped)
    req_rows = max(1, tile_s // 128)

    tr, rows = _choose_tile_rows(rows0, req_rows, cap_rows, B)
    S_pad = rows * 128
    if S_pad != S:
        x = jnp.pad(x, ((0, 0), (0, 0), (0, S_pad - S)))
    x = x.reshape(B, C, rows, 128)

    grid = (B, rows // tr)

    out = pl.pallas_call(
        autoshape_head_kernel,
        out_shape=jax.ShapeDtypeStruct((B, OUT, rows, 128), out_dtype),
        grid=grid,
        in_specs=[
            pl.BlockSpec((1, C, tr, 128), lambda bi, si: (bi, 0, si, 0)),
            pl.BlockSpec(memory_space=pltpu.MemorySpace.SMEM),   # w_s scalars
            pl.BlockSpec(memory_space=pltpu.MemorySpace.SMEM),   # b_s scalars
        ],
        out_specs=pl.BlockSpec((1, OUT, tr, 128), lambda bi, si: (bi, 0, si, 0)),
        compiler_params=pltpu.CompilerParams(
            dimension_semantics=("parallel", "parallel"),
        ),
    )(x, w_s, b_s)

    out = out.reshape(B, OUT, S_pad)
    if S_pad != S:
        out = out[:, :, :S]

    # TODO(synk): non_max_suppression / scale_boxes / Detections bookkeeping are
    # data-dependent, variable-length, host/IO-heavy post-processing with no
    # clean Pallas equivalent (note: this output is channel-major (B, OUT, S)).
    return out


if __name__ == "__main__":
    # Small shapes consistent with the module's image-batch forward.
    B, C, H, W = 2, 3, 16, 16
    NC = 4                       # synthetic number of classes
    OUT = 5 + NC                 # YOLO head output channels: box(4)+obj(1)+cls

    key = jax.random.PRNGKey(0)
    k_im, k_w, k_b = jax.random.split(key, 3)

    # Deterministic synthetic inputs/parameters (uint8 pixels, like real images).
    ims = jax.random.randint(k_im, (B, C, H, W), 0, 256, dtype=jnp.int32).astype(jnp.uint8)
    w = jax.random.normal(k_w, (C, OUT), jnp.float32) * 0.1
    b = jax.random.normal(k_b, (1, OUT), jnp.float32) * 0.1

    pred = autoshape_forward(ims, w, b)
    pred = jax.block_until_ready(pred)

    # Pure-JAX reference of the same numeric core (preprocess /255 + head).
    S = H * W
    x_f = ims.astype(jnp.float32).reshape(B, C, S) / 255.0
    ref = jax.nn.sigmoid(jnp.einsum("co,bcs->bos", w, x_f) + b.reshape(1, OUT, 1))

    assert pred.shape == (B, OUT, S)
    # bf16 output + approx reciprocal -> compare against f32 reference loosely.
    assert jnp.allclose(pred.astype(jnp.float32), ref, atol=2e-2, rtol=2e-2)

    print("KERNEL_OK")
</pallas_src>

<mosaic_0001>
module attributes {stable_mosaic.version = 11 : i64} {
  func.func @autoshape_head_kernel(%arg0: i32, %arg1: i32, %arg2: memref<1x3x2x128xi8, #tpu.memory_space<vmem>>, %arg3: memref<27xf32, #tpu.memory_space<smem>>, %arg4: memref<9xf32, #tpu.memory_space<smem>>, %arg5: memref<1x9x2x128xbf16, #tpu.memory_space<vmem>>) attributes {dimension_semantics = [#tpu.dimension_semantics<parallel>, #tpu.dimension_semantics<parallel>], iteration_bounds = array<i64: 2, 1>, scalar_prefetch = 0 : i64, scratch_operands = 0 : i64, tpu.core_type = #tpu.core_type<tc>, window_params = [{transform_indices = @transform_0, window_bounds = array<i64: 1, 3, 2, 128>}, {transform_indices = @transform_1, window_bounds = array<i64: 27>}, {transform_indices = @transform_2, window_bounds = array<i64: 9>}, {transform_indices = @transform_3, window_bounds = array<i64: 1, 9, 2, 128>}]} {
    %c0 = arith.constant 0 : index
    %c0_0 = arith.constant 0 : index
    %c0_1 = arith.constant 0 : index
    %c0_2 = arith.constant 0 : index
    %0 = vector.load %arg2[%c0, %c0_0, %c0_1, %c0_2] : memref<1x3x2x128xi8, #tpu.memory_space<vmem>>, vector<1x3x2x128xi8>
    %1 = vector.shape_cast %0 : vector<1x3x2x128xi8> to vector<3x2x128xi8>
    %2 = arith.uitofp %1 : vector<3x2x128xi8> to vector<3x2x128xf32>
    %3 = vector.extract_strided_slice %2 {offsets = [0, 0, 0], sizes = [1, 2, 128], strides = [1, 1, 1]} : vector<3x2x128xf32> to vector<1x2x128xf32>
    %4 = vector.shape_cast %3 : vector<1x2x128xf32> to vector<2x128xf32>
    %c0_3 = arith.constant 0 : index
    %5 = memref.load %arg3[%c0_3] : memref<27xf32, #tpu.memory_space<smem>>
    %6 = vector.broadcast %5 : f32 to vector<2x128xf32>
    %7 = arith.mulf %4, %6 : vector<2x128xf32>
    %c0_4 = arith.constant 0 : index
    %8 = memref.load %arg4[%c0_4] : memref<9xf32, #tpu.memory_space<smem>>
    %9 = vector.broadcast %8 : f32 to vector<2x128xf32>
    %10 = arith.addf %7, %9 : vector<2x128xf32>
    %11 = vector.extract_strided_slice %2 {offsets = [1, 0, 0], sizes = [1, 2, 128], strides = [1, 1, 1]} : vector<3x2x128xf32> to vector<1x2x128xf32>
    %12 = vector.shape_cast %11 : vector<1x2x128xf32> to vector<2x128xf32>
    %c1 = arith.constant 1 : index
    %13 = memref.load %arg3[%c1] : memref<27xf32, #tpu.memory_space<smem>>
    %14 = vector.broadcast %13 : f32 to vector<2x128xf32>
    %15 = arith.mulf %12, %14 : vector<2x128xf32>
    %16 = arith.addf %10, %15 : vector<2x128xf32>
    %17 = vector.extract_strided_slice %2 {offsets = [2, 0, 0], sizes = [1, 2, 128], strides = [1, 1, 1]} : vector<3x2x128xf32> to vector<1x2x128xf32>
    %18 = vector.shape_cast %17 : vector<1x2x128xf32> to vector<2x128xf32>
    %c2 = arith.constant 2 : index
    %19 = memref.load %arg3[%c2] : memref<27xf32, #tpu.memory_space<smem>>
    %20 = vector.broadcast %19 : f32 to vector<2x128xf32>
    %21 = arith.mulf %18, %20 : vector<2x128xf32>
    %22 = arith.addf %16, %21 : vector<2x128xf32>
    %cst = arith.constant 0.000000e+00 : f32
    %23 = vector.broadcast %cst : f32 to vector<2x128xf32>
    %24 = arith.subf %23, %22 : vector<2x128xf32>
    %25 = math.exp %24 : vector<2x128xf32>
    %cst_5 = arith.constant 1.000000e+00 : f32
    %26 = vector.broadcast %cst_5 : f32 to vector<2x128xf32>
    %27 = arith.addf %26, %25 : vector<2x128xf32>
    %28 = tpu.reciprocal %27 {approx = true} : vector<2x128xf32> -> vector<2x128xf32>
    %29 = arith.truncf %28 : vector<2x128xf32> to vector<2x128xbf16>
    %c0_6 = arith.constant 0 : index
    %c0_7 = arith.constant 0 : index
    %c0_8 = arith.constant 0 : index
    %c0_9 = arith.constant 0 : index
    %30 = vector.load %arg5[%c0_6, %c0_7, %c0_8, %c0_9] : memref<1x9x2x128xbf16, #tpu.memory_space<vmem>>, vector<1x1x2x128xbf16>
    %31 = vector.shape_cast %30 : vector<1x1x2x128xbf16> to vector<2x128xbf16>
    %32 = vector.shape_cast %29 : vector<2x128xbf16> to vector<1x1x2x128xbf16>
    tpu.vector_store %arg5[%c0_6, %c0_7, %c0_8, %c0_9], %32 {strides = array<i32>} : memref<1x9x2x128xbf16, #tpu.memory_space<vmem>>, vector<1x1x2x128xbf16>,
    %33 = vector.extract_strided_slice %2 {offsets = [0, 0, 0], sizes = [1, 2, 128], strides = [1, 1, 1]} : vector<3x2x128xf32> to vector<1x2x128xf32>
    %34 = vector.shape_cast %33 : vector<1x2x128xf32> to vector<2x128xf32>
    %c3 = arith.constant 3 : index
    %35 = memref.load %arg3[%c3] : memref<27xf32, #tpu.memory_space<smem>>
    %36 = vector.broadcast %35 : f32 to vector<2x128xf32>
    %37 = arith.mulf %34, %36 : vector<2x128xf32>
    %c1_10 = arith.constant 1 : index
    %38 = memref.load %arg4[%c1_10] : memref<9xf32, #tpu.memory_space<smem>>
    %39 = vector.broadcast %38 : f32 to vector<2x128xf32>
    %40 = arith.addf %37, %39 : vector<2x128xf32>
    %41 = vector.extract_strided_slice %2 {offsets = [1, 0, 0], sizes = [1, 2, 128], strides = [1, 1, 1]} : vector<3x2x128xf32> to vector<1x2x128xf32>
    %42 = vector.shape_cast %41 : vector<1x2x128xf32> to vector<2x128xf32>
    %c4 = arith.constant 4 : index
    %43 = memref.load %arg3[%c4] : memref<27xf32, #tpu.memory_space<smem>>
    %44 = vector.broadcast %43 : f32 to vector<2x128xf32>
    %45 = arith.mulf %42, %44 : vector<2x128xf32>
    %46 = arith.addf %40, %45 : vector<2x128xf32>
    %47 = vector.extract_strided_slice %2 {offsets = [2, 0, 0], sizes = [1, 2, 128], strides = [1, 1, 1]} : vector<3x2x128xf32> to vector<1x2x128xf32>
    %48 = vector.shape_cast %47 : vector<1x2x128xf32> to vector<2x128xf32>
    %c5 = arith.constant 5 : index
    %49 = memref.load %arg3[%c5] : memref<27xf32, #tpu.memory_space<smem>>
    %50 = vector.broadcast %49 : f32 to vector<2x128xf32>
    %51 = arith.mulf %48, %50 : vector<2x128xf32>
    %52 = arith.addf %46, %51 : vector<2x128xf32>
    %cst_11 = arith.constant 0.000000e+00 : f32
    %53 = vector.broadcast %cst_11 : f32 to vector<2x128xf32>
    %54 = arith.subf %53, %52 : vector<2x128xf32>
    %55 = math.exp %54 : vector<2x128xf32>
    %cst_12 = arith.constant 1.000000e+00 : f32
    %56 = vector.broadcast %cst_12 : f32 to vector<2x128xf32>
    %57 = arith.addf %56, %55 : vector<2x128xf32>
    %58 = tpu.reciprocal %57 {approx = true} : vector<2x128xf32> -> vector<2x128xf32>
    %59 = arith.truncf %58 : vector<2x128xf32> to vector<2x128xbf16>
    %c0_13 = arith.constant 0 : index
    %c1_14 = arith.constant 1 : index
    %c0_15 = arith.constant 0 : index
    %c0_16 = arith.constant 0 : index
    %60 = vector.load %arg5[%c0_13, %c1_14, %c0_15, %c0_16] : memref<1x9x2x128xbf16, #tpu.memory_space<vmem>>, vector<1x1x2x128xbf16>
    %61 = vector.shape_cast %60 : vector<1x1x2x128xbf16> to vector<2x128xbf16>
    %62 = vector.shape_cast %59 : vector<2x128xbf16> to vector<1x1x2x128xbf16>
    tpu.vector_store %arg5[%c0_13, %c1_14, %c0_15, %c0_16], %62 {strides = array<i32>} : memref<1x9x2x128xbf16, #tpu.memory_space<vmem>>, vector<1x1x2x128xbf16>,
    %63 = vector.extract_strided_slice %2 {offsets = [0, 0, 0], sizes = [1, 2, 128], strides = [1, 1, 1]} : vector<3x2x128xf32> to vector<1x2x128xf32>
    %64 = vector.shape_cast %63 : vector<1x2x128xf32> to vector<2x128xf32>
    %c6 = arith.constant 6 : index
    %65 = memref.load %arg3[%c6] : memref<27xf32, #tpu.memory_space<smem>>
    %66 = vector.broadcast %65 : f32 to vector<2x128xf32>
    %67 = arith.mulf %64, %66 : vector<2x128xf32>
    %c2_17 = arith.constant 2 : index
    %68 = memref.load %arg4[%c2_17] : memref<9xf32, #tpu.memory_space<smem>>
    %69 = vector.broadcast %68 : f32 to vector<2x128xf32>
    %70 = arith.addf %67, %69 : vector<2x128xf32>
    %71 = vector.extract_strided_slice %2 {offsets = [1, 0, 0], sizes = [1, 2, 128], strides = [1, 1, 1]} : vector<3x2x128xf32> to vector<1x2x128xf32>
    %72 = vector.shape_cast %71 : vector<1x2x128xf32> to vector<2x128xf32>
    %c7 = arith.constant 7 : index
    %73 = memref.load %arg3[%c7] : memref<27xf32, #tpu.memory_space<smem>>
    %74 = vector.broadcast %73 : f32 to vector<2x128xf32>
    %75 = arith.mulf %72, %74 : vector<2x128xf32>
    %76 = arith.addf %70, %75 : vector<2x128xf32>
    %77 = vector.extract_strided_slice %2 {offsets = [2, 0, 0], sizes = [1, 2, 128], strides = [1, 1, 1]} : vector<3x2x128xf32> to vector<1x2x128xf32>
    %78 = vector.shape_cast %77 : vector<1x2x128xf32> to vector<2x128xf32>
    %c8 = arith.constant 8 : index
    %79 = memref.load %arg3[%c8] : memref<27xf32, #tpu.memory_space<smem>>
    %80 = vector.broadcast %79 : f32 to vector<2x128xf32>
    %81 = arith.mulf %78, %80 : vector<2x128xf32>
    %82 = arith.addf %76, %81 : vector<2x128xf32>
    %cst_18 = arith.constant 0.000000e+00 : f32
    %83 = vector.broadcast %cst_18 : f32 to vector<2x128xf32>
    %84 = arith.subf %83, %82 : vector<2x128xf32>
    %85 = math.exp %84 : vector<2x128xf32>
    %cst_19 = arith.constant 1.000000e+00 : f32
    %86 = vector.broadcast %cst_19 : f32 to vector<2x128xf32>
    %87 = arith.addf %86, %85 : vector<2x128xf32>
    %88 = tpu.reciprocal %87 {approx = true} : vector<2x128xf32> -> vector<2x128xf32>
    %89 = arith.truncf %88 : vector<2x128xf32> to vector<2x128xbf16>
    %c0_20 = arith.constant 0 : index
    %c2_21 = arith.constant 2 : index
    %c0_22 = arith.constant 0 : index
    %c0_23 = arith.constant 0 : index
    %90 = vector.load %arg5[%c0_20, %c2_21, %c0_22, %c0_23] : memref<1x9x2x128xbf16, #tpu.memory_space<vmem>>, vector<1x1x2x128xbf16>
    %91 = vector.shape_cast %90 : vector<1x1x2x128xbf16> to vector<2x128xbf16>
    %92 = vector.shape_cast %89 : vector<2x128xbf16> to vector<1x1x2x128xbf16>
    tpu.vector_store %arg5[%c0_20, %c2_21, %c0_22, %c0_23], %92 {strides = array<i32>} : memref<1x9x2x128xbf16, #tpu.memory_space<vmem>>, vector<1x1x2x128xbf16>,
    %93 = vector.extract_strided_slice %2 {offsets = [0, 0, 0], sizes = [1, 2, 128], strides = [1, 1, 1]} : vector<3x2x128xf32> to vector<1x2x128xf32>
    %94 = vector.shape_cast %93 : vector<1x2x128xf32> to vector<2x128xf32>
    %c9 = arith.constant 9 : index
    %95 = memref.load %arg3[%c9] : memref<27xf32, #tpu.memory_space<smem>>
    %96 = vector.broadcast %95 : f32 to vector<2x128xf32>
    %97 = arith.mulf %94, %96 : vector<2x128xf32>
    %c3_24 = arith.constant 3 : index
    %98 = memref.load %arg4[%c3_24] : memref<9xf32, #tpu.memory_space<smem>>
    %99 = vector.broadcast %98 : f32 to vector<2x128xf32>
    %100 = arith.addf %97, %99 : vector<2x128xf32>
    %101 = vector.extract_strided_slice %2 {offsets = [1, 0, 0], sizes = [1, 2, 128], strides = [1, 1, 1]} : vector<3x2x128xf32> to vector<1x2x128xf32>
    %102 = vector.shape_cast %101 : vector<1x2x128xf32> to vector<2x128xf32>
    %c10 = arith.constant 10 : index
    %103 = memref.load %arg3[%c10] : memref<27xf32, #tpu.memory_space<smem>>
    %104 = vector.broadcast %103 : f32 to vector<2x128xf32>
    %105 = arith.mulf %102, %104 : vector<2x128xf32>
    %106 = arith.addf %100, %105 : vector<2x128xf32>
    %107 = vector.extract_strided_slice %2 {offsets = [2, 0, 0], sizes = [1, 2, 128], strides = [1, 1, 1]} : vector<3x2x128xf32> to vector<1x2x128xf32>
    %108 = vector.shape_cast %107 : vector<1x2x128xf32> to vector<2x128xf32>
    %c11 = arith.constant 11 : index
    %109 = memref.load %arg3[%c11] : memref<27xf32, #tpu.memory_space<smem>>
    %110 = vector.broadcast %109 : f32 to vector<2x128xf32>
    %111 = arith.mulf %108, %110 : vector<2x128xf32>
    %112 = arith.addf %106, %111 : vector<2x128xf32>
    %cst_25 = arith.constant 0.000000e+00 : f32
    %113 = vector.broadcast %cst_25 : f32 to vector<2x128xf32>
    %114 = arith.subf %113, %112 : vector<2x128xf32>
    %115 = math.exp %114 : vector<2x128xf32>
    %cst_26 = arith.constant 1.000000e+00 : f32
    %116 = vector.broadcast %cst_26 : f32 to vector<2x128xf32>
    %117 = arith.addf %116, %115 : vector<2x128xf32>
    %118 = tpu.reciprocal %117 {approx = true} : vector<2x128xf32> -> vector<2x128xf32>
    %119 = arith.truncf %118 : vector<2x128xf32> to vector<2x128xbf16>
    %c0_27 = arith.constant 0 : index
    %c3_28 = arith.constant 3 : index
    %c0_29 = arith.constant 0 : index
    %c0_30 = arith.constant 0 : index
    %120 = vector.load %arg5[%c0_27, %c3_28, %c0_29, %c0_30] : memref<1x9x2x128xbf16, #tpu.memory_space<vmem>>, vector<1x1x2x128xbf16>
    %121 = vector.shape_cast %120 : vector<1x1x2x128xbf16> to vector<2x128xbf16>
    %122 = vector.shape_cast %119 : vector<2x128xbf16> to vector<1x1x2x128xbf16>
    tpu.vector_store %arg5[%c0_27, %c3_28, %c0_29, %c0_30], %122 {strides = array<i32>} : memref<1x9x2x128xbf16, #tpu.memory_space<vmem>>, vector<1x1x2x128xbf16>,
    %123 = vector.extract_strided_slice %2 {offsets = [0, 0, 0], sizes = [1, 2, 128], strides = [1, 1, 1]} : vector<3x2x128xf32> to vector<1x2x128xf32>
    %124 = vector.shape_cast %123 : vector<1x2x128xf32> to vector<2x128xf32>
    %c12 = arith.constant 12 : index
    %125 = memref.load %arg3[%c12] : memref<27xf32, #tpu.memory_space<smem>>
    %126 = vector.broadcast %125 : f32 to vector<2x128xf32>
    %127 = arith.mulf %124, %126 : vector<2x128xf32>
    %c4_31 = arith.constant 4 : index
    %128 = memref.load %arg4[%c4_31] : memref<9xf32, #tpu.memory_space<smem>>
    %129 = vector.broadcast %128 : f32 to vector<2x128xf32>
    %130 = arith.addf %127, %129 : vector<2x128xf32>
    %131 = vector.extract_strided_slice %2 {offsets = [1, 0, 0], sizes = [1, 2, 128], strides = [1, 1, 1]} : vector<3x2x128xf32> to vector<1x2x128xf32>
    %132 = vector.shape_cast %131 : vector<1x2x128xf32> to vector<2x128xf32>
    %c13 = arith.constant 13 : index
    %133 = memref.load %arg3[%c13] : memref<27xf32, #tpu.memory_space<smem>>
    %134 = vector.broadcast %133 : f32 to vector<2x128xf32>
    %135 = arith.mulf %132, %134 : vector<2x128xf32>
    %136 = arith.addf %130, %135 : vector<2x128xf32>
    %137 = vector.extract_strided_slice %2 {offsets = [2, 0, 0], sizes = [1, 2, 128], strides = [1, 1, 1]} : vector<3x2x128xf32> to vector<1x2x128xf32>
    %138 = vector.shape_cast %137 : vector<1x2x128xf32> to vector<2x128xf32>
    %c14 = arith.constant 14 : index
    %139 = memref.load %arg3[%c14] : memref<27xf32, #tpu.memory_space<smem>>
    %140 = vector.broadcast %139 : f32 to vector<2x128xf32>
    %141 = arith.mulf %138, %140 : vector<2x128xf32>
    %142 = arith.addf %136, %141 : vector<2x128xf32>
    %cst_32 = arith.constant 0.000000e+00 : f32
    %143 = vector.broadcast %cst_32 : f32 to vector<2x128xf32>
    %144 = arith.subf %143, %142 : vector<2x128xf32>
    %145 = math.exp %144 : vector<2x128xf32>
    %cst_33 = arith.constant 1.000000e+00 : f32
    %146 = vector.broadcast %cst_33 : f32 to vector<2x128xf32>
    %147 = arith.addf %146, %145 : vector<2x128xf32>
    %148 = tpu.reciprocal %147 {approx = true} : vector<2x128xf32> -> vector<2x128xf32>
    %149 = arith.truncf %148 : vector<2x128xf32> to vector<2x128xbf16>
    %c0_34 = arith.constant 0 : index
    %c4_35 = arith.constant 4 : index
    %c0_36 = arith.constant 0 : index
    %c0_37 = arith.constant 0 : index
    %150 = vector.load %arg5[%c0_34, %c4_35, %c0_36, %c0_37] : memref<1x9x2x128xbf16, #tpu.memory_space<vmem>>, vector<1x1x2x128xbf16>
    %151 = vector.shape_cast %150 : vector<1x1x2x128xbf16> to vector<2x128xbf16>
    %152 = vector.shape_cast %149 : vector<2x128xbf16> to vector<1x1x2x128xbf16>
    tpu.vector_store %arg5[%c0_34, %c4_35, %c0_36, %c0_37], %152 {strides = array<i32>} : memref<1x9x2x128xbf16, #tpu.memory_space<vmem>>, vector<1x1x2x128xbf16>,
    %153 = vector.extract_strided_slice %2 {offsets = [0, 0, 0], sizes = [1, 2, 128], strides = [1, 1, 1]} : vector<3x2x128xf32> to vector<1x2x128xf32>
    %154 = vector.shape_cast %153 : vector<1x2x128xf32> to vector<2x128xf32>
    %c15 = arith.constant 15 : index
    %155 = memref.load %arg3[%c15] : memref<27xf32, #tpu.memory_space<smem>>
    %156 = vector.broadcast %155 : f32 to vector<2x128xf32>
    %157 = arith.mulf %154, %156 : vector<2x128xf32>
    %c5_38 = arith.constant 5 : index
    %158 = memref.load %arg4[%c5_38] : memref<9xf32, #tpu.memory_space<smem>>
    %159 = vector.broadcast %158 : f32 to vector<2x128xf32>
    %160 = arith.addf %157, %159 : vector<2x128xf32>
    %161 = vector.extract_strided_slice %2 {offsets = [1, 0, 0], sizes = [1, 2, 128], strides = [1, 1, 1]} : vector<3x2x128xf32> to vector<1x2x128xf32>
    %162 = vector.shape_cast %161 : vector<1x2x128xf32> to vector<2x128xf32>
    %c16 = arith.constant 16 : index
    %163 = memref.load %arg3[%c16] : memref<27xf32, #tpu.memory_space<smem>>
    %164 = vector.broadcast %163 : f32 to vector<2x128xf32>
    %165 = arith.mulf %162, %164 : vector<2x128xf32>
    %166 = arith.addf %160, %165 : vector<2x128xf32>
    %167 = vector.extract_strided_slice %2 {offsets = [2, 0, 0], sizes = [1, 2, 128], strides = [1, 1, 1]} : vector<3x2x128xf32> to vector<1x2x128xf32>
    %168 = vector.shape_cast %167 : vector<1x2x128xf32> to vector<2x128xf32>
    %c17 = arith.constant 17 : index
    %169 = memref.load %arg3[%c17] : memref<27xf32, #tpu.memory_space<smem>>
    %170 = vector.broadcast %169 : f32 to vector<2x128xf32>
    %171 = arith.mulf %168, %170 : vector<2x128xf32>
    %172 = arith.addf %166, %171 : vector<2x128xf32>
    %cst_39 = arith.constant 0.000000e+00 : f32
    %173 = vector.broadcast %cst_39 : f32 to vector<2x128xf32>
    %174 = arith.subf %173, %172 : vector<2x128xf32>
    %175 = math.exp %174 : vector<2x128xf32>
    %cst_40 = arith.constant 1.000000e+00 : f32
    %176 = vector.broadcast %cst_40 : f32 to vector<2x128xf32>
    %177 = arith.addf %176, %175 : vector<2x128xf32>
    %178 = tpu.reciprocal %177 {approx = true} : vector<2x128xf32> -> vector<2x128xf32>
    %179 = arith.truncf %178 : vector<2x128xf32> to vector<2x128xbf16>
    %c0_41 = arith.constant 0 : index
    %c5_42 = arith.constant 5 : index
    %c0_43 = arith.constant 0 : index
    %c0_44 = arith.constant 0 : index
    %180 = vector.load %arg5[%c0_41, %c5_42, %c0_43, %c0_44] : memref<1x9x2x128xbf16, #tpu.memory_space<vmem>>, vector<1x1x2x128xbf16>
    %181 = vector.shape_cast %180 : vector<1x1x2x128xbf16> to vector<2x128xbf16>
    %182 = vector.shape_cast %179 : vector<2x128xbf16> to vector<1x1x2x128xbf16>
    tpu.vector_store %arg5[%c0_41, %c5_42, %c0_43, %c0_44], %182 {strides = array<i32>} : memref<1x9x2x128xbf16, #tpu.memory_space<vmem>>, vector<1x1x2x128xbf16>,
    %183 = vector.extract_strided_slice %2 {offsets = [0, 0, 0], sizes = [1, 2, 128], strides = [1, 1, 1]} : vector<3x2x128xf32> to vector<1x2x128xf32>
    %184 = vector.shape_cast %183 : vector<1x2x128xf32> to vector<2x128xf32>
    %c18 = arith.constant 18 : index
    %185 = memref.load %arg3[%c18] : memref<27xf32, #tpu.memory_space<smem>>
    %186 = vector.broadcast %185 : f32 to vector<2x128xf32>
    %187 = arith.mulf %184, %186 : vector<2x128xf32>
    %c6_45 = arith.constant 6 : index
    %188 = memref.load %arg4[%c6_45] : memref<9xf32, #tpu.memory_space<smem>>
    %189 = vector.broadcast %188 : f32 to vector<2x128xf32>
    %190 = arith.addf %187, %189 : vector<2x128xf32>
    %191 = vector.extract_strided_slice %2 {offsets = [1, 0, 0], sizes = [1, 2, 128], strides = [1, 1, 1]} : vector<3x2x128xf32> to vector<1x2x128xf32>
    %192 = vector.shape_cast %191 : vector<1x2x128xf32> to vector<2x128xf32>
    %c19 = arith.constant 19 : index
    %193 = memref.load %arg3[%c19] : memref<27xf32, #tpu.memory_space<smem>>
    %194 = vector.broadcast %193 : f32 to vector<2x128xf32>
    %195 = arith.mulf %192, %194 : vector<2x128xf32>
    %196 = arith.addf %190, %195 : vector<2x128xf32>
    %197 = vector.extract_strided_slice %2 {offsets = [2, 0, 0], sizes = [1, 2, 128], strides = [1, 1, 1]} : vector<3x2x128xf32> to vector<1x2x128xf32>
    %198 = vector.shape_cast %197 : vector<1x2x128xf32> to vector<2x128xf32>
    %c20 = arith.constant 20 : index
    %199 = memref.load %arg3[%c20] : memref<27xf32, #tpu.memory_space<smem>>
    %200 = vector.broadcast %199 : f32 to vector<2x128xf32>
    %201 = arith.mulf %198, %200 : vector<2x128xf32>
    %202 = arith.addf %196, %201 : vector<2x128xf32>
    %cst_46 = arith.constant 0.000000e+00 : f32
    %203 = vector.broadcast %cst_46 : f32 to vector<2x128xf32>
    %204 = arith.subf %203, %202 : vector<2x128xf32>
    %205 = math.exp %204 : vector<2x128xf32>
    %cst_47 = arith.constant 1.000000e+00 : f32
    %206 = vector.broadcast %cst_47 : f32 to vector<2x128xf32>
    %207 = arith.addf %206, %205 : vector<2x128xf32>
    %208 = tpu.reciprocal %207 {approx = true} : vector<2x128xf32> -> vector<2x128xf32>
    %209 = arith.truncf %208 : vector<2x128xf32> to vector<2x128xbf16>
    %c0_48 = arith.constant 0 : index
    %c6_49 = arith.constant 6 : index
    %c0_50 = arith.constant 0 : index
    %c0_51 = arith.constant 0 : index
    %210 = vector.load %arg5[%c0_48, %c6_49, %c0_50, %c0_51] : memref<1x9x2x128xbf16, #tpu.memory_space<vmem>>, vector<1x1x2x128xbf16>
    %211 = vector.shape_cast %210 : vector<1x1x2x128xbf16> to vector<2x128xbf16>
    %212 = vector.shape_cast %209 : vector<2x128xbf16> to vector<1x1x2x128xbf16>
    tpu.vector_store %arg5[%c0_48, %c6_49, %c0_50, %c0_51], %212 {strides = array<i32>} : memref<1x9x2x128xbf16, #tpu.memory_space<vmem>>, vector<1x1x2x128xbf16>,
    %213 = vector.extract_strided_slice %2 {offsets = [0, 0, 0], sizes = [1, 2, 128], strides = [1, 1, 1]} : vector<3x2x128xf32> to vector<1x2x128xf32>
    %214 = vector.shape_cast %213 : vector<1x2x128xf32> to vector<2x128xf32>
    %c21 = arith.constant 21 : index
    %215 = memref.load %arg3[%c21] : memref<27xf32, #tpu.memory_space<smem>>
    %216 = vector.broadcast %215 : f32 to vector<2x128xf32>
    %217 = arith.mulf %214, %216 : vector<2x128xf32>
    %c7_52 = arith.constant 7 : index
    %218 = memref.load %arg4[%c7_52] : memref<9xf32, #tpu.memory_space<smem>>
    %219 = vector.broadcast %218 : f32 to vector<2x128xf32>
    %220 = arith.addf %217, %219 : vector<2x128xf32>
    %221 = vector.extract_strided_slice %2 {offsets = [1, 0, 0], sizes = [1, 2, 128], strides = [1, 1, 1]} : vector<3x2x128xf32> to vector<1x2x128xf32>
    %222 = vector.shape_cast %221 : vector<1x2x128xf32> to vector<2x128xf32>
    %c22 = arith.constant 22 : index
    %223 = memref.load %arg3[%c22] : memref<27xf32, #tpu.memory_space<smem>>
    %224 = vector.broadcast %223 : f32 to vector<2x128xf32>
    %225 = arith.mulf %222, %224 : vector<2x128xf32>
    %226 = arith.addf %220, %225 : vector<2x128xf32>
    %227 = vector.extract_strided_slice %2 {offsets = [2, 0, 0], sizes = [1, 2, 128], strides = [1, 1, 1]} : vector<3x2x128xf32> to vector<1x2x128xf32>
    %228 = vector.shape_cast %227 : vector<1x2x128xf32> to vector<2x128xf32>
    %c23 = arith.constant 23 : index
    %229 = memref.load %arg3[%c23] : memref<27xf32, #tpu.memory_space<smem>>
    %230 = vector.broadcast %229 : f32 to vector<2x128xf32>
    %231 = arith.mulf %228, %230 : vector<2x128xf32>
    %232 = arith.addf %226, %231 : vector<2x128xf32>
    %cst_53 = arith.constant 0.000000e+00 : f32
    %233 = vector.broadcast %cst_53 : f32 to vector<2x128xf32>
    %234 = arith.subf %233, %232 : vector<2x128xf32>
    %235 = math.exp %234 : vector<2x128xf32>
    %cst_54 = arith.constant 1.000000e+00 : f32
    %236 = vector.broadcast %cst_54 : f32 to vector<2x128xf32>
    %237 = arith.addf %236, %235 : vector<2x128xf32>
    %238 = tpu.reciprocal %237 {approx = true} : vector<2x128xf32> -> vector<2x128xf32>
    %239 = arith.truncf %238 : vector<2x128xf32> to vector<2x128xbf16>
    %c0_55 = arith.constant 0 : index
    %c7_56 = arith.constant 7 : index
    %c0_57 = arith.constant 0 : index
    %c0_58 = arith.constant 0 : index
    %240 = vector.load %arg5[%c0_55, %c7_56, %c0_57, %c0_58] : memref<1x9x2x128xbf16, #tpu.memory_space<vmem>>, vector<1x1x2x128xbf16>
    %241 = vector.shape_cast %240 : vector<1x1x2x128xbf16> to vector<2x128xbf16>
    %242 = vector.shape_cast %239 : vector<2x128xbf16> to vector<1x1x2x128xbf16>
    tpu.vector_store %arg5[%c0_55, %c7_56, %c0_57, %c0_58], %242 {strides = array<i32>} : memref<1x9x2x128xbf16, #tpu.memory_space<vmem>>, vector<1x1x2x128xbf16>,
    %243 = vector.extract_strided_slice %2 {offsets = [0, 0, 0], sizes = [1, 2, 128], strides = [1, 1, 1]} : vector<3x2x128xf32> to vector<1x2x128xf32>
    %244 = vector.shape_cast %243 : vector<1x2x128xf32> to vector<2x128xf32>
    %c24 = arith.constant 24 : index
    %245 = memref.load %arg3[%c24] : memref<27xf32, #tpu.memory_space<smem>>
    %246 = vector.broadcast %245 : f32 to vector<2x128xf32>
    %247 = arith.mulf %244, %246 : vector<2x128xf32>
    %c8_59 = arith.constant 8 : index
    %248 = memref.load %arg4[%c8_59] : memref<9xf32, #tpu.memory_space<smem>>
    %249 = vector.broadcast %248 : f32 to vector<2x128xf32>
    %250 = arith.addf %247, %249 : vector<2x128xf32>
    %251 = vector.extract_strided_slice %2 {offsets = [1, 0, 0], sizes = [1, 2, 128], strides = [1, 1, 1]} : vector<3x2x128xf32> to vector<1x2x128xf32>
    %252 = vector.shape_cast %251 : vector<1x2x128xf32> to vector<2x128xf32>
    %c25 = arith.constant 25 : index
    %253 = memref.load %arg3[%c25] : memref<27xf32, #tpu.memory_space<smem>>
    %254 = vector.broadcast %253 : f32 to vector<2x128xf32>
    %255 = arith.mulf %252, %254 : vector<2x128xf32>
    %256 = arith.addf %250, %255 : vector<2x128xf32>
    %257 = vector.extract_strided_slice %2 {offsets = [2, 0, 0], sizes = [1, 2, 128], strides = [1, 1, 1]} : vector<3x2x128xf32> to vector<1x2x128xf32>
    %258 = vector.shape_cast %257 : vector<1x2x128xf32> to vector<2x128xf32>
    %c26 = arith.constant 26 : index
    %259 = memref.load %arg3[%c26] : memref<27xf32, #tpu.memory_space<smem>>
    %260 = vector.broadcast %259 : f32 to vector<2x128xf32>
    %261 = arith.mulf %258, %260 : vector<2x128xf32>
    %262 = arith.addf %256, %261 : vector<2x128xf32>
    %cst_60 = arith.constant 0.000000e+00 : f32
    %263 = vector.broadcast %cst_60 : f32 to vector<2x128xf32>
    %264 = arith.subf %263, %262 : vector<2x128xf32>
    %265 = math.exp %264 : vector<2x128xf32>
    %cst_61 = arith.constant 1.000000e+00 : f32
    %266 = vector.broadcast %cst_61 : f32 to vector<2x128xf32>
    %267 = arith.addf %266, %265 : vector<2x128xf32>
    %268 = tpu.reciprocal %267 {approx = true} : vector<2x128xf32> -> vector<2x128xf32>
    %269 = arith.truncf %268 : vector<2x128xf32> to vector<2x128xbf16>
    %c0_62 = arith.constant 0 : index
    %c8_63 = arith.constant 8 : index
    %c0_64 = arith.constant 0 : index
    %c0_65 = arith.constant 0 : index
    %270 = vector.load %arg5[%c0_62, %c8_63, %c0_64, %c0_65] : memref<1x9x2x128xbf16, #tpu.memory_space<vmem>>, vector<1x1x2x128xbf16>
    %271 = vector.shape_cast %270 : vector<1x1x2x128xbf16> to vector<2x128xbf16>
    %272 = vector.shape_cast %269 : vector<2x128xbf16> to vector<1x1x2x128xbf16>
    tpu.vector_store %arg5[%c0_62, %c8_63, %c0_64, %c0_65], %272 {strides = array<i32>} : memref<1x9x2x128xbf16, #tpu.memory_space<vmem>>, vector<1x1x2x128xbf16>,
    return
  }
  func.func @transform_0(%arg0: i32, %arg1: i32) -> (i32, i32, i32, i32) {
    %c0_i32 = arith.constant 0 : i32
    %c0_i32_0 = arith.constant 0 : i32
    %c0_i32_1 = arith.constant 0 : i32
    return %arg0, %c0_i32, %arg1, %c0_i32_0 : i32, i32, i32, i32
  }
  func.func @transform_1(%arg0: i32, %arg1: i32) -> i32 {
    %c0_i32 = arith.constant 0 : i32
    %c0_i32_0 = arith.constant 0 : i32
    return %c0_i32 : i32
  }
  func.func @transform_2(%arg0: i32, %arg1: i32) -> i32 {
    %c0_i32 = arith.constant 0 : i32
    %c0_i32_0 = arith.constant 0 : i32
    return %c0_i32 : i32
  }
  func.func @transform_3(%arg0: i32, %arg1: i32) -> (i32, i32, i32, i32) {
    %c0_i32 = arith.constant 0 : i32
    %c0_i32_0 = arith.constant 0 : i32
    %c0_i32_1 = arith.constant 0 : i32
    return %arg0, %c0_i32, %arg1, %c0_i32_0 : i32, i32, i32, i32
  }
}

</mosaic_0001>

<llo_original>
// kernel: tpu_custom_call.1
$region0: #{tpu_custom_call.1}
  #allocation0 [shape = 'u32[]', space=smem, size = 0x4, offset = 0x4, fixed_abs, tag = 'smem constant byte address 0x4 - core index']
  #allocation1 [shape = 'u32[144,128]{1,0:T(1,128)}', space=vmem, size = 0x12000, scoped, tag = 'internal scratch']
  %s0 = inlined_call_operand.vmem [shape: u8[2,3,2,128], index: 0, kind: input, shape index: {}]
  %s1 = inlined_call_operand.vmem [shape: f32[27], index: 1, kind: input, shape index: {}]
  %s2 = inlined_call_operand.vmem [shape: f32[9], index: 2, kind: input, shape index: {}]
  %s3 = inlined_call_operand.hbm [shape: bf16[2,9,2,128], index: 3, kind: output, shape index: {}]
  %s4 = sld [smem:[#allocation0]]
  $region53: #{tpu_custom_call.1} parent=0
    _
  %s6 = ssub.s32 1, %s4
  %s7 = scalar_select 0, %s6, %s4
  $region1: #{tpu_custom_call.1} parent=0
    #allocation2 [shape = 'u8[512]{0}', space=smem, size = 0x200, scoped, tag = 'input window, operand 1, single buffered']
    #allocation3 [shape = 's32[2]{0}', space=sflag, size = 0x8, scoped, tag = 'scoped memory for tpu_custom_call.1']
    #allocation4 [shape = 's32[2]{0}', space=sflag, size = 0x8, scoped, tag = 'scoped memory for tpu_custom_call.1']
    #allocation5 [shape = 'u8[512]{0}', space=smem, size = 0x200, scoped, tag = 'input window, operand 2, single buffered']
    #allocation6 [shape = 's32[1]{0}', space=sflag, size = 0x4, scoped, tag = 'scoped memory for tpu_custom_call.1']
    #allocation7 [shape = 'u8[9216]{0}', space=vmem, size = 0x2400, scoped, tag = 'output window, operand 0']
    %8 = vsyncpa [#allocation4], 0
    %9 = vsyncpa [#allocation6], 0
    %10 = vsyncpa [#allocation3], 0
    %s11 = scalar_lea.sflag [#allocation3], 1
    %12 = vsyncpa %s11, 0
    loop: start=0, step=1, limit=4
    $region2: #{tpu_custom_call.1} parent=1 // loop_pre_header
      _
    $region3: #{tpu_custom_call.1} parent=1 // loop_header
      %s14 = sphi 0, %s18
      %p15 = scmp.ge.s32.totalorder %s14, 4
      %s21 = sphi 0, %s33
      %s22 = sphi 0, %s29
      %s23 = sphi 0, %s21
      %s24 = sphi 0, %s22
      %s25 = sphi 0, %s23
      %s26 = sphi 0, %s24
      %s38 = sphi 0, %s40
      %s41 = sphi 0, %s38
      %s42 = sphi 0, %s41
      %s58 = sphi 0, %s42
      %s62 = sphi 0, %s62
      %s64 = sphi 0, %s62
      %s65 = sphi 0, %s64
      %s79 = sphi 0, %s65
      %s83 = sphi 0, %s83
      %s85 = sphi 0, %s83
      %s86 = sphi 0, %s85
      %s100 = sphi 0, %s86
      %s108 = sphi 0, %s110
      %s111 = sphi 0, %s108
      %s112 = sphi 0, %s111
      %s128 = sphi 0, %s112
    $region4: #{tpu_custom_call.1} parent=1 // loop_header_branch
      %17 = sbr.rel (%p15) target = $region8
    $region5: #{tpu_custom_call.1} parent=1 // loop_body
      %s19 = ssub.s32 %s14, 1
      %s20 = ssub.s32 %s14, 2
      %s27 = sadd.s32 1, %s22
      %p28 = scmp.ge.s32.totalorder %s27, 1
      %s29 = scalar_select %p28, 0, %s27
      %s30 = sadd.s32 1, %s21
      %s31 = scalar_select %p28, %s30, %s21
      %p32 = scmp.ge.s32.totalorder %s31, 2
      %s33 = scalar_select %p32, 0, %s31
      %s34 = ssub.s32 %s21, %s33
      %s35 = ssub.s32 %s22, %s29
      %s36 = sor.u32 %s34, %s35
      %p37 = scmp.eq.s32.totalorder %s36, 0
      %s39 = sadd.s32 %s38, 1
      %s40 = scalar_select %p37, %s38, %s39
      %p43 = pneg %p37
      %p44 = scmp.eq.s32.totalorder %s14, 1
      %p45 = por %p43, %p44
      %p46 = scmp.ne.s32.totalorder %s38, %s41
      %p47 = scmp.eq.s32.totalorder %s14, 0
      %p48 = por %p46, %p47
      %p49 = scmp.ne.s32.totalorder %s38, %s41
      %p50 = scmp.eq.s32.totalorder %s19, 1
      %p51 = por %p49, %p50
      %p52 = scmp.ne.s32.totalorder %s41, %s42
      %p53 = scmp.eq.s32.totalorder %s19, 0
      %p54 = por %p52, %p53
      %p55 = scmp.ne.s32.totalorder %s41, %s42
      %p56 = scmp.eq.s32.totalorder %s20, 1
      %p57 = por %p55, %p56
      %p59 = scmp.ne.s32.totalorder %s42, %s58
      %p60 = scmp.eq.s32.totalorder %s20, 0
      %p61 = por %p59, %p60
      %s63 = sadd.s32 %s62, 1
      %p66 = scmp.eq.s32.totalorder %s14, 1
      %p67 = scmp.ne.s32.totalorder %s62, %s64
      %p68 = scmp.eq.s32.totalorder %s14, 0
      %p69 = por %p67, %p68
      %p70 = scmp.ne.s32.totalorder %s62, %s64
      %p71 = scmp.eq.s32.totalorder %s19, 1
      %p72 = por %p70, %p71
      %p73 = scmp.ne.s32.totalorder %s64, %s65
      %p74 = scmp.eq.s32.totalorder %s19, 0
      %p75 = por %p73, %p74
      %p76 = scmp.ne.s32.totalorder %s64, %s65
      %p77 = scmp.eq.s32.totalorder %s20, 1
      %p78 = por %p76, %p77
      %p80 = scmp.ne.s32.totalorder %s65, %s79
      %p81 = scmp.eq.s32.totalorder %s20, 0
      %p82 = por %p80, %p81
      %s84 = sadd.s32 %s83, 1
      %p87 = scmp.eq.s32.totalorder %s14, 1
      %p88 = scmp.ne.s32.totalorder %s83, %s85
      %p89 = scmp.eq.s32.totalorder %s14, 0
      %p90 = por %p88, %p89
      %p91 = scmp.ne.s32.totalorder %s83, %s85
      %p92 = scmp.eq.s32.totalorder %s19, 1
      %p93 = por %p91, %p92
      %p94 = scmp.ne.s32.totalorder %s85, %s86
      %p95 = scmp.eq.s32.totalorder %s19, 0
      %p96 = por %p94, %p95
      %p97 = scmp.ne.s32.totalorder %s85, %s86
      %p98 = scmp.eq.s32.totalorder %s20, 1
      %p99 = por %p97, %p98
      %p101 = scmp.ne.s32.totalorder %s86, %s100
      %p102 = scmp.eq.s32.totalorder %s20, 0
      %p103 = por %p101, %p102
      %s104 = ssub.s32 %s21, %s33
      %s105 = ssub.s32 %s22, %s29
      %s106 = sor.u32 %s104, %s105
      %p107 = scmp.eq.s32.totalorder %s106, 0
      %s109 = sadd.s32 %s108, 1
      %s110 = scalar_select %p107, %s108, %s109
      %p113 = pneg %p107
      %p114 = scmp.eq.s32.totalorder %s14, 1
      %p115 = por %p113, %p114
      %p116 = scmp.ne.s32.totalorder %s108, %s111
      %p117 = scmp.eq.s32.totalorder %s14, 0
      %p118 = por %p116, %p117
      %p119 = scmp.ne.s32.totalorder %s108, %s111
      %p120 = scmp.eq.s32.totalorder %s19, 1
      %p121 = por %p119, %p120
      %p122 = scmp.ne.s32.totalorder %s111, %s112
      %p123 = scmp.eq.s32.totalorder %s19, 0
      %p124 = por %p122, %p123
      %p125 = scmp.ne.s32.totalorder %s111, %s112
      %p126 = scmp.eq.s32.totalorder %s20, 1
      %p127 = por %p125, %p126
      %p129 = scmp.ne.s32.totalorder %s112, %s128
      %p130 = scmp.eq.s32.totalorder %s20, 0
      %p131 = por %p129, %p130
      %p132 = scmp.le.s32.totalorder 1, %s14
      %p133 = scmp.lt.s32.totalorder %s14, 3
      %p134 = pnand %p132, %p133
      %p135 = pneg %p134
      // Predicated region
      $region9: #{tpu_custom_call.1} parent=5 // pred_check
        _
      $region10: #{tpu_custom_call.1} parent=5 // pred_check_branch
        %137 = sbr.rel (%p134) target = $region12
      $region11: #{tpu_custom_call.1} parent=5 // pred_region
        %s138 = ssub.s32 %s14, 1
        // Predicated region
        $region13: #{tpu_custom_call.1} parent=11 // pred_check
          %p139 = pneg %p75
        $region14: #{tpu_custom_call.1} parent=11 // pred_check_branch
          %141 = sbr.rel (%p139) target = $region16
        $region15: #{tpu_custom_call.1} parent=11 // pred_region
          %s143 = ssub.s32 16, 16
          %144 = vsyncadd [#allocation4], %s143
          %s146 = sshll.u32 %s1, 4
          %s147 = int_to_ptr.vmem [resolvable:$true] %s146
          %149 = dma.vmem_to_smem %s147, 16, [#allocation2], [#allocation4]
        $region16: #{tpu_custom_call.1} parent=11 // pred_fallthru
          _
        // Predicated region
        $region17: #{tpu_custom_call.1} parent=11 // pred_check
          %p150 = pneg %p96
        $region18: #{tpu_custom_call.1} parent=11 // pred_check_branch
          %152 = sbr.rel (%p150) target = $region20
        $region19: #{tpu_custom_call.1} parent=11 // pred_region
          %s154 = ssub.s32 16, 16
          %155 = vsyncadd [#allocation6], %s154
          %s157 = sshll.u32 %s2, 4
          %s158 = int_to_ptr.vmem [resolvable:$true] %s157
          %160 = dma.vmem_to_smem %s158, 16, [#allocation5], [#allocation6]
        $region20: #{tpu_custom_call.1} parent=11 // pred_fallthru
          _
      $region12: #{tpu_custom_call.1} parent=5 // pred_fallthru
        _
      %p161 = scmp.lt.s32.totalorder %s14, 2
      // Predicated region
      $region21: #{tpu_custom_call.1} parent=5 // pred_check
        %p162 = pneg %p161
      $region22: #{tpu_custom_call.1} parent=5 // pred_check_branch
        %164 = sbr.rel (%p162) target = $region24
      $region23: #{tpu_custom_call.1} parent=5 // pred_region
        // Predicated region
        $region25: #{tpu_custom_call.1} parent=23 // pred_check
          %p165 = pneg %p48
        $region26: #{tpu_custom_call.1} parent=23 // pred_check_branch
          %167 = sbr.rel (%p165) target = $region28
        $region27: #{tpu_custom_call.1} parent=23 // pred_region
          %p168 = scmp.lt.s32.totalorder %s21, 1
          %s169 = scalar_select %p168, %s21, 1
          %p170 = scmp.lt.s32.totalorder %s22, 0
          %s171 = scalar_select %p170, %s22, 0
          %s172 = smul.addr %s169, 3
          %s173 = sadd.s32 %s171, %s172
          %s174 = scalar_lea.vmem %s0, %s173
        $region28: #{tpu_custom_call.1} parent=23 // pred_fallthru
          _
      $region24: #{tpu_custom_call.1} parent=5 // pred_fallthru
        _
      %p175 = scmp.le.s32.totalorder 1, %s14
      %p176 = scmp.lt.s32.totalorder %s14, 3
      %p177 = pnand %p175, %p176
      %p178 = pneg %p177
      // Predicated region
      $region29: #{tpu_custom_call.1} parent=5 // pred_check
        _
      $region30: #{tpu_custom_call.1} parent=5 // pred_check_branch
        %180 = sbr.rel (%p177) target = $region32
      $region31: #{tpu_custom_call.1} parent=5 // pred_region
        %s181 = ssub.s32 %s14, 1
        // Predicated region
        $region33: #{tpu_custom_call.1} parent=31 // pred_check
          %p182 = pneg %p75
        $region34: #{tpu_custom_call.1} parent=31 // pred_check_branch
          %184 = sbr.rel (%p182) target = $region36
        $region35: #{tpu_custom_call.1} parent=31 // pred_region
          %185 = dma.done [#allocation4], 16
        $region36: #{tpu_custom_call.1} parent=31 // pred_fallthru
          _
        // Predicated region
        $region37: #{tpu_custom_call.1} parent=31 // pred_check
          %p186 = pneg %p96
        $region38: #{tpu_custom_call.1} parent=31 // pred_check_branch
          %188 = sbr.rel (%p186) target = $region40
        $region39: #{tpu_custom_call.1} parent=31 // pred_region
          %189 = dma.done [#allocation6], 16
        $region40: #{tpu_custom_call.1} parent=31 // pred_fallthru
          _
        %190 = sfence
        %p191 = scmp.lt.s32.totalorder %s23, 1
        %s192 = scalar_select %p191, %s23, 1
        %p193 = scmp.lt.s32.totalorder %s24, 0
        %s194 = scalar_select %p193, %s24, 0
        %s195 = smul.addr %s192, 3
        %s196 = sadd.s32 %s194, %s195
        %s197 = scalar_lea.vmem %s0, %s196
        %p198 = pneg %p54
        %p199 = pneg %p51
        %p200 = pneg %p75
        %p201 = pneg %p72
        %p202 = pneg %p96
        %p203 = pneg %p93
        %p204 = pneg %p124
        %p205 = pneg %p121
        %s206 = sand.u32 %s111, 1
        %s207 = scalar_lea.sflag [#allocation3], %s206
        %s208 = sand.u32 %s111, 1
        %s209 = smul.addr %s208, 9
        %s210 = scalar_lea.vmem [#allocation7], %s209
        %p211 = scmp.lt.s32.totalorder %s23, 1
        %s212 = scalar_select %p211, %s23, 1
        %p213 = scmp.lt.s32.totalorder %s24, 0
        %s214 = scalar_select %p213, %s24, 0
        %s215 = smul.addr %s212, 3
        %s216 = sadd.s32 %s214, %s215
        %s217 = scalar_lea.vmem %s0, %s216
        %v218 = vld [vmem:[%s217] sm:$0x1]
        %v219 = vld [vmem:[%s217 + $0x1] sm:$0x1]
        %v220 = vld [vmem:[%s217 + $0x2] sm:$0x1]
        %v221 = vunpack.c.0.s8 %v218
        %v222 = vunpack.c.0.s8 %v219
        %v223 = vunpack.c.0.s8 %v220
        %v224 = vand.u32 %v221, 255
        %v225 = vand.u32 %v222, 255
        %v226 = vand.u32 %v223, 255
        %v227 = vcvt.s32.f32 %v224
        %v228 = vcvt.s32.f32 %v225
        %v229 = vcvt.s32.f32 %v226
        %s230 = sld [smem:[#allocation2]]
        %v231 = vstv %s230
        %v232 = vmul.f32 %v227, %v231
        %s233 = sld [smem:[#allocation5]]
        %v234 = vstv %s233
        %v235 = vadd.f32 %v232, %v234
        %s236 = sld [smem:[#allocation2 + $0x1]]
        %v237 = vstv %s236
        %v238 = vmul.f32 %v228, %v237
        %v239 = vadd.f32 %v235, %v238
        %s240 = sld [smem:[#allocation2 + $0x2]]
        %v241 = vstv %s240
        %v242 = vmul.f32 %v229, %v241
        %v243 = vadd.f32 %v239, %v242
        %v244 = vsub.f32 0.0, %v243
        %v245 = vmul.f32 %v244, 1.442695
        %v246 = vpow.pop %v245
        %v247 = vadd.f32 %v246, 1.0
        %v248 = vrcp.pop %v247
        %v249 = vpack.c.bf16 %v248, %v248
        %250 = vst [vmem:[%s210] sm:$0x1] %v249
        %s251 = sld [smem:[#allocation2 + $0x3]]
        %v252 = vstv %s251
        %v253 = vmul.f32 %v227, %v252
        %s254 = sld [smem:[#allocation5 + $0x1]]
        %v255 = vstv %s254
        %v256 = vadd.f32 %v253, %v255
        %s257 = sld [smem:[#allocation2 + $0x4]]
        %v258 = vstv %s257
        %v259 = vmul.f32 %v228, %v258
        %v260 = vadd.f32 %v256, %v259
        %s261 = sld [smem:[#allocation2 + $0x5]]
        %v262 = vstv %s261
        %v263 = vmul.f32 %v229, %v262
        %v264 = vadd.f32 %v260, %v263
        %v265 = vsub.f32 0.0, %v264
        %v266 = vmul.f32 %v265, 1.442695
        %v267 = vpow.pop %v266
        %v268 = vadd.f32 %v267, 1.0
        %v269 = vrcp.pop %v268
        %v270 = vpack.c.bf16 %v269, %v269
        %s271 = scalar_lea.vmem %s210, 1 [#allocation7]
        %272 = vst [vmem:[%s271] sm:$0x1] %v270
        %s273 = sld [smem:[#allocation2 + $0x6]]
        %v274 = vstv %s273
        %v275 = vmul.f32 %v227, %v274
        %s276 = sld [smem:[#allocation5 + $0x2]]
        %v277 = vstv %s276
        %v278 = vadd.f32 %v275, %v277
        %s279 = sld [smem:[#allocation2 + $0x7]]
        %v280 = vstv %s279
        %v281 = vmul.f32 %v228, %v280
        %v282 = vadd.f32 %v278, %v281
        %s283 = sld [smem:[#allocation2 + $0x8]]
        %v284 = vstv %s283
        %v285 = vmul.f32 %v229, %v284
        %v286 = vadd.f32 %v282, %v285
        %v287 = vsub.f32 0.0, %v286
        %v288 = vmul.f32 %v287, 1.442695
        %v289 = vpow.pop %v288
        %v290 = vadd.f32 %v289, 1.0
        %v291 = vrcp.pop %v290
        %v292 = vpack.c.bf16 %v291, %v291
        %s293 = scalar_lea.vmem %s210, 2 [#allocation7]
        %294 = vst [vmem:[%s293] sm:$0x1] %v292
        %s295 = sld [smem:[#allocation2 + $0x9]]
        %v296 = vstv %s295
        %v297 = vmul.f32 %v227, %v296
        %s298 = sld [smem:[#allocation5 + $0x3]]
        %v299 = vstv %s298
        %v300 = vadd.f32 %v297, %v299
        %s301 = sld [smem:[#allocation2 + $0xa]]
        %v302 = vstv %s301
        %v303 = vmul.f32 %v228, %v302
        %v304 = vadd.f32 %v300, %v303
        %s305 = sld [smem:[#allocation2 + $0xb]]
        %v306 = vstv %s305
        %v307 = vmul.f32 %v229, %v306
        %v308 = vadd.f32 %v304, %v307
        %v309 = vsub.f32 0.0, %v308
        %v310 = vmul.f32 %v309, 1.442695
        %v311 = vpow.pop %v310
        %v312 = vadd.f32 %v311, 1.0
        %v313 = vrcp.pop %v312
        %v314 = vpack.c.bf16 %v313, %v313
        %s315 = scalar_lea.vmem %s210, 3 [#allocation7]
        %316 = vst [vmem:[%s315] sm:$0x1] %v314
        %s317 = sld [smem:[#allocation2 + $0xc]]
        %v318 = vstv %s317
        %v319 = vmul.f32 %v227, %v318
        %s320 = sld [smem:[#allocation5 + $0x4]]
        %v321 = vstv %s320
        %v322 = vadd.f32 %v319, %v321
        %s323 = sld [smem:[#allocation2 + $0xd]]
        %v324 = vstv %s323
        %v325 = vmul.f32 %v228, %v324
        %v326 = vadd.f32 %v322, %v325
        %s327 = sld [smem:[#allocation2 + $0xe]]
        %v328 = vstv %s327
        %v329 = vmul.f32 %v229, %v328
        %v330 = vadd.f32 %v326, %v329
        %v331 = vsub.f32 0.0, %v330
        %v332 = vmul.f32 %v331, 1.442695
        %v333 = vpow.pop %v332
        %v334 = vadd.f32 %v333, 1.0
        %v335 = vrcp.pop %v334
        %v336 = vpack.c.bf16 %v335, %v335
        %s337 = scalar_lea.vmem %s210, 4 [#allocation7]
        %338 = vst [vmem:[%s337] sm:$0x1] %v336
        %s339 = sld [smem:[#allocation2 + $0xf]]
        %v340 = vstv %s339
        %v341 = vmul.f32 %v227, %v340
        %s342 = sld [smem:[#allocation5 + $0x5]]
        %v343 = vstv %s342
        %v344 = vadd.f32 %v341, %v343
        %s345 = sld [smem:[#allocation2 + $0x10]]
        %v346 = vstv %s345
        %v347 = vmul.f32 %v228, %v346
        %v348 = vadd.f32 %v344, %v347
        %s349 = sld [smem:[#allocation2 + $0x11]]
        %v350 = vstv %s349
        %v351 = vmul.f32 %v229, %v350
        %v352 = vadd.f32 %v348, %v351
        %v353 = vsub.f32 0.0, %v352
        %v354 = vmul.f32 %v353, 1.442695
        %v355 = vpow.pop %v354
        %v356 = vadd.f32 %v355, 1.0
        %v357 = vrcp.pop %v356
        %v358 = vpack.c.bf16 %v357, %v357
        %s359 = scalar_lea.vmem %s210, 5 [#allocation7]
        %360 = vst [vmem:[%s359] sm:$0x1] %v358
        %s361 = sld [smem:[#allocation2 + $0x12]]
        %v362 = vstv %s361
        %v363 = vmul.f32 %v227, %v362
        %s364 = sld [smem:[#allocation5 + $0x6]]
        %v365 = vstv %s364
        %v366 = vadd.f32 %v363, %v365
        %s367 = sld [smem:[#allocation2 + $0x13]]
        %v368 = vstv %s367
        %v369 = vmul.f32 %v228, %v368
        %v370 = vadd.f32 %v366, %v369
        %s371 = sld [smem:[#allocation2 + $0x14]]
        %v372 = vstv %s371
        %v373 = vmul.f32 %v229, %v372
        %v374 = vadd.f32 %v370, %v373
        %v375 = vsub.f32 0.0, %v374
        %v376 = vmul.f32 %v375, 1.442695
        %v377 = vpow.pop %v376
        %v378 = vadd.f32 %v377, 1.0
        %v379 = vrcp.pop %v378
        %v380 = vpack.c.bf16 %v379, %v379
        %s381 = scalar_lea.vmem %s210, 6 [#allocation7]
        %382 = vst [vmem:[%s381] sm:$0x1] %v380
        %s383 = sld [smem:[#allocation2 + $0x15]]
        %v384 = vstv %s383
        %v385 = vmul.f32 %v227, %v384
        %s386 = sld [smem:[#allocation5 + $0x7]]
        %v387 = vstv %s386
        %v388 = vadd.f32 %v385, %v387
        %s389 = sld [smem:[#allocation2 + $0x16]]
        %v390 = vstv %s389
        %v391 = vmul.f32 %v228, %v390
        %v392 = vadd.f32 %v388, %v391
        %s393 = sld [smem:[#allocation2 + $0x17]]
        %v394 = vstv %s393
        %v395 = vmul.f32 %v229, %v394
        %v396 = vadd.f32 %v392, %v395
        %v397 = vsub.f32 0.0, %v396
        %v398 = vmul.f32 %v397, 1.442695
        %v399 = vpow.pop %v398
        %v400 = vadd.f32 %v399, 1.0
        %v401 = vrcp.pop %v400
        %v402 = vpack.c.bf16 %v401, %v401
        %s403 = scalar_lea.vmem %s210, 7 [#allocation7]
        %404 = vst [vmem:[%s403] sm:$0x1] %v402
        %s405 = sld [smem:[#allocation2 + $0x18]]
        %v406 = vstv %s405
        %v407 = vmul.f32 %v227, %v406
        %s408 = sld [smem:[#allocation5 + $0x8]]
        %v409 = vstv %s408
        %v410 = vadd.f32 %v407, %v409
        %s411 = sld [smem:[#allocation2 + $0x19]]
        %v412 = vstv %s411
        %v413 = vmul.f32 %v228, %v412
        %v414 = vadd.f32 %v410, %v413
        %s415 = sld [smem:[#allocation2 + $0x1a]]
        %v416 = vstv %s415
        %v417 = vmul.f32 %v229, %v416
        %v418 = vadd.f32 %v414, %v417
        %v419 = vsub.f32 0.0, %v418
        %v420 = vmul.f32 %v419, 1.442695
        %v421 = vpow.pop %v420
        %v422 = vadd.f32 %v421, 1.0
        %v423 = vrcp.pop %v422
        %v424 = vpack.c.bf16 %v423, %v423
        %s425 = scalar_lea.vmem %s210, 8 [#allocation7]
        %426 = vst [vmem:[%s425] sm:$0x1] %v424
        %s427 = sand.u32 %s111, 1
        %s428 = scalar_lea.sflag [#allocation3], %s427
        %s429 = sand.u32 %s111, 1
        %s430 = smul.addr %s429, 9
        %s431 = scalar_lea.vmem [#allocation7], %s430
        // Predicated region
        $region41: #{tpu_custom_call.1} parent=31 // pred_check
          %p432 = pneg %p121
        $region42: #{tpu_custom_call.1} parent=31 // pred_check_branch
          %434 = sbr.rel (%p432) target = $region44
        $region43: #{tpu_custom_call.1} parent=31 // pred_region
          %s436 = ssub.s32 144, 144
          %437 = vsyncadd %s428, %s436
          %s438 = smul.addr %s23, 9
          %s439 = sadd.s32 %s24, %s438
          %s440 = smul.addr %s439, 16
          %s441 = scalar_lea.hbm %s3, %s440
          %s442 = sshll.u32 %s431, 4
          %s443 = int_to_ptr.vmem [resolvable:$true] %s442
          %448 = dma.vmem_to_hbm [thread:$0]  %s443, 144, %s441, %s428, 16, 16, 1
        $region44: #{tpu_custom_call.1} parent=31 // pred_fallthru
          _
      $region32: #{tpu_custom_call.1} parent=5 // pred_fallthru
        _
      %p449 = scmp.le.s32.totalorder 2, %s14
      // Predicated region
      $region45: #{tpu_custom_call.1} parent=5 // pred_check
        %p450 = pneg %p449
      $region46: #{tpu_custom_call.1} parent=5 // pred_check_branch
        %452 = sbr.rel (%p450) target = $region48
      $region47: #{tpu_custom_call.1} parent=5 // pred_region
        %s453 = ssub.s32 %s14, 2
        // Predicated region
        $region49: #{tpu_custom_call.1} parent=47 // pred_check
          %p454 = pneg %p127
        $region50: #{tpu_custom_call.1} parent=47 // pred_check_branch
          %456 = sbr.rel (%p454) target = $region52
        $region51: #{tpu_custom_call.1} parent=47 // pred_region
          %s457 = sand.u32 %s112, 1
          %s458 = scalar_lea.sflag [#allocation3], %s457
          %s459 = sand.u32 %s112, 1
          %s460 = smul.addr %s459, 9
          %s461 = scalar_lea.vmem [#allocation7], %s460
          %462 = dma.done %s458, 144
        $region52: #{tpu_custom_call.1} parent=47 // pred_fallthru
          _
      $region48: #{tpu_custom_call.1} parent=5 // pred_fallthru
        _
    $region6: #{tpu_custom_call.1} parent=1 // loop_footer
      %s18 = sadd.s32 1, %s14
    $region7: #{tpu_custom_call.1} parent=1 // loop_footer_branch
      %13 = sbr.rel target = $region3
    $region8: #{tpu_custom_call.1} parent=1 // loop_exit
      _
    %463 = vsyncpa [#allocation3], 1
    %s464 = scalar_lea.sflag [#allocation3], 1
    %465 = vsyncpa %s464, 1
    %466 = vsyncpa [#allocation4], 1
    %s467 = scalar_lea.sflag [#allocation4], 1
    %468 = vsyncpa %s467, 1
    %469 = vsyncpa [#allocation6], 1

</llo_original>
